<compile_context>
chip_gen: v7x
topology: tpu7x:2x2x1
jax: 0.10.0
libtpu: 0.0.40
codegen_flags: <defaults>
</compile_context>

<pallas_src>
import math
import jax
import jax.numpy as jnp
from jax.experimental import pallas as pl
from jax.experimental.pallas import tpu as pltpu


def _round_up(x, m):
    return ((x + m - 1) // m) * m


# ----------------------------------------------------------------------------- kernel
def _make_kernel(num_experts, out_width, imp_threshold, has_kv, has_mask):
    E = num_experts

    def kernel(*refs):
        f32 = jnp.float32
        idx = 0
        x_ref = refs[idx]; idx += 1
        if has_kv:
            kv_ref = refs[idx]; idx += 1
        w1 = refs[idx]; b1 = refs[idx + 1]; w2 = refs[idx + 2]; b2 = refs[idx + 3]
        idx += 4
        if has_kv:
            wk1 = refs[idx]; bk1 = refs[idx + 1]; wk2 = refs[idx + 2]; bk2 = refs[idx + 3]
            idx += 4
        if has_mask:
            mbias = refs[idx]; idx += 1
        o_ref = refs[idx]

        x = x_ref[...]

        # Fused first layer: [h_imp | h_router_imp | h_router_unimp]
        h = jnp.maximum(jnp.dot(x, w1[...], preferred_element_type=f32) + b1[...], 0.0)
        # Fused (block-diagonal) second layer:
        #   col 0        -> importance logit
        #   cols 1:1+E   -> router_important logits  (cache correction folded in)
        #   cols 1+E:    -> router_unimportant logits (cache correction folded in)
        z = jnp.dot(h, w2[...], preferred_element_type=f32) + b2[...]

        importance = jax.nn.sigmoid(z[:, 0:1])
        if has_kv:
            kv = kv_ref[...]
            hk = jnp.maximum(jnp.dot(kv, wk1[...], preferred_element_type=f32) + bk1[...], 0.0)
            kimp = jax.nn.sigmoid(jnp.dot(hk, wk2[...], preferred_element_type=f32) + bk2[...])
            importance = (importance + kimp) * 0.5

        logits_imp = z[:, 1:1 + E]
        logits_unimp = z[:, 1 + E:1 + 2 * E]
        logits = jnp.where(importance > imp_threshold, logits_imp, logits_unimp)
        if has_mask:
            logits = logits + mbias[...]          # additive -1e9 mask, as in PyTorch

        # softmax over experts (EUP reciprocal for the normalization)
        m = jnp.max(logits, axis=-1, keepdims=True)
        e = jnp.exp(logits - m)
        probs = e * pl.reciprocal(jnp.sum(e, axis=-1, keepdims=True), approx=True)

        # lane-dense packed output: [probs (E) | importance (1) | zero pad]
        rows = probs.shape[0]
        pad = jnp.zeros((rows, out_width - E - 1), f32)
        o_ref[...] = jnp.concatenate([probs, importance, pad], axis=-1)

    return kernel


# --------------------------------------------------------------------------- wrapper
def pikv_router_forward(params, hidden_states, kv_states=None, expert_mask=None,
                        *, top_k=2, capacity_factor=1.5, imp_threshold=0.5,
                        cache_update_interval=100, token_block=512):
    f32 = jnp.float32
    B, S, H = hidden_states.shape
    H2 = params['wi1'].shape[1]
    E = params['wr2'].shape[1]
    top_k = min(top_k, E)
    N = B * S
    has_kv = kv_states is not None
    has_mask = expert_mask is not None

    # ---- fold / fuse the tiny weights (host side, negligible cost) ----
    ccf = params['cache_correction_factor'].astype(f32).reshape(1, E)
    W1 = jnp.concatenate([params['wi1'], params['wr1'], params['wu1']], axis=1).astype(f32)
    b1 = jnp.concatenate([params['bi1'], params['br1'], params['bu1']]).astype(f32).reshape(1, -1)
    D1 = H2 + 2 * H
    D2 = 1 + 2 * E
    W2 = jnp.zeros((D1, D2), f32)
    W2 = W2.at[:H2, 0:1].set(params['wi2'].astype(f32))
    W2 = W2.at[H2:H2 + H, 1:1 + E].set(params['wr2'].astype(f32) * ccf)
    W2 = W2.at[H2 + H:, 1 + E:].set(params['wu2'].astype(f32) * ccf)
    b2 = jnp.concatenate([params['bi2'].astype(f32),
                          params['br2'].astype(f32) * ccf[0],
                          params['bu2'].astype(f32) * ccf[0]]).reshape(1, D2)

    # ---- token tiling: big tile, multiple of 8, within a conservative VMEM budget ----
    OUT_W = _round_up(E + 1, 128)
    TB = max(8, _round_up(min(token_block, _round_up(N, 8)), 8))

    def _vmem_estimate(tb):
        tok = tb * H * 4 * (2 if has_kv else 1) * 2        # double-buffered token streams
        out = tb * OUT_W * 4 * 2                           # double-buffered output slab
        wts = (H * D1 + D1 + D1 * D2 + D2) * 4 * 2
        if has_kv:
            wts += (H * H2 + H2 + H2 + 1) * 4 * 2
        if has_mask:
            wts += E * 4 * 2
        return tok + out + wts

    VMEM_BUDGET = 24 * 1024 * 1024      # safe on v5e/v6e (128 MiB) and v7x (64 MiB)
    while TB > 8 and _vmem_estimate(TB) > VMEM_BUDGET:
        TB = max(8, _round_up(TB // 2, 8))

    Npad = _round_up(N, TB)
    x = hidden_states.reshape(N, H).astype(f32)
    if Npad != N:
        x = jnp.pad(x, ((0, Npad - N), (0, 0)))      # padded rows dropped after the call
    grid = (Npad // TB,)

    tok_map = lambda i: (i, 0)
    const_map = lambda i: (0, 0)

    in_arrays = [x]
    in_specs = [pl.BlockSpec((TB, H), tok_map)]
    if has_kv:
        kv = kv_states.reshape(N, H).astype(f32)
        if Npad != N:
            kv = jnp.pad(kv, ((0, Npad - N), (0, 0)))
        in_arrays.append(kv)
        in_specs.append(pl.BlockSpec((TB, H), tok_map))

    consts = [W1, b1, W2, b2]
    if has_kv:
        consts += [params['wk1'].astype(f32), params['bk1'].astype(f32).reshape(1, H2),
                   params['wk2'].astype(f32), params['bk2'].astype(f32).reshape(1, 1)]
    if has_mask:
        consts.append((1.0 - expert_mask.reshape(1, E).astype(f32)) * (-1e9))
    in_arrays += consts
    in_specs += [pl.BlockSpec(a.shape, const_map) for a in consts]

    slab = pl.pallas_call(
        _make_kernel(E, OUT_W, imp_threshold, has_kv, has_mask),
        out_shape=jax.ShapeDtypeStruct((Npad, OUT_W), f32),
        grid_spec=pltpu.PrefetchScalarGridSpec(
            num_scalar_prefetch=0, grid=grid,
            in_specs=in_specs,
            out_specs=pl.BlockSpec((TB, OUT_W), tok_map)),
        compiler_params=pltpu.CompilerParams(
            dimension_semantics=("parallel",),
            vmem_limit_bytes=32 * 1024 * 1024),
    )(*in_arrays)

    probs = slab[:N, :E]                    # [N, E]
    importance = slab[:N, E:E + 1]          # [N, 1]

    # ---- top-k + capacity-constrained dispatch / combine (plain-JAX glue) ----
    topk_probs, topk_idx = jax.lax.top_k(probs, top_k)
    topk_probs = topk_probs / jnp.sum(topk_probs, axis=-1, keepdims=True)
    capacity = int(B * S * capacity_factor * top_k / E)

    dispatch = jnp.zeros((N, E, capacity), f32)
    combine = jnp.zeros((N, E, capacity), f32)
    expert_count = jnp.zeros((E,), jnp.int32)
    for i in range(top_k):
        e_idx = topk_idx[:, i]                                # [N]
        prob = topk_probs[:, i]                               # [N]
        cnt = expert_count[e_idx]                             # [N]
        mask = cnt < capacity
        slot = jnp.clip(cnt, 0, max(capacity - 1, 0))
        upd = (mask.astype(f32)[:, None, None]
               * jax.nn.one_hot(e_idx, E, dtype=f32)[:, :, None]
               * jax.nn.one_hot(slot, capacity, dtype=f32)[:, None, :])
        dispatch = jnp.where(upd > 0, 1.0, dispatch)
        combine = jnp.where(upd > 0, prob[:, None, None], combine)
        # PyTorch's vectorized `expert_count[idx] += 1` with duplicate indices is a
        # non-accumulating index_put: +1 per unique expert present this round.
        present = jnp.zeros((E,), jnp.int32).at[e_idx].max(mask.astype(jnp.int32))
        expert_count = expert_count + present
    dispatch = dispatch.reshape(B, S, E, capacity)
    combine = combine.reshape(B, S, E, capacity)

    router_probs = probs.reshape(B, S, E)
    importance_out = importance.reshape(B, S, 1)

    # ---- aux loss + cache-usage buffer update (returned as new state) ----
    expert_usage = jnp.sum(probs, axis=0)
    expert_usage_norm = expert_usage / jnp.sum(expert_usage)
    new_hist = 0.9 * params['cache_usage_history'] + 0.1 * expert_usage_norm
    new_counter = params['update_counter'] + 1
    refresh = (new_counter % cache_update_interval) == 0
    ccf_new = 1.0 / (new_hist + 0.5)
    ccf_new = ccf_new / jnp.mean(ccf_new)
    new_ccf = jnp.where(refresh, ccf_new, params['cache_correction_factor'])

    rppe = jnp.mean(probs, axis=0)
    aux_loss = jnp.sum(rppe * jnp.log(rppe * E + 1e-9))
    aux_loss = aux_loss + 0.05 * jnp.sum(new_hist * expert_usage_norm)

    return (dispatch, combine, router_probs, aux_loss, importance_out,
            new_hist, new_counter, new_ccf)


# --------------------------------------------------------------- pure-JAX reference
def _ref_probs_importance(params, x, kv, thr):
    def mlp(v, w1, b1, w2, b2):
        return jax.nn.relu(v @ w1 + b1) @ w2 + b2
    imp = jax.nn.sigmoid(mlp(x, params['wi1'], params['bi1'], params['wi2'], params['bi2']))
    if kv is not None:
        kimp = jax.nn.sigmoid(mlp(kv, params['wk1'], params['bk1'], params['wk2'], params['bk2']))
        importance = (imp + kimp) * 0.5
    else:
        importance = imp
    m = (importance > thr).astype(jnp.float32)
    li = mlp(x, params['wr1'], params['br1'], params['wr2'], params['br2'])
    lu = mlp(x, params['wu1'], params['bu1'], params['wu2'], params['bu2'])
    logits = (m * li + (1.0 - m) * lu) * params['cache_correction_factor']
    return jax.nn.softmax(logits, axis=-1), importance


# ------------------------------------------------------------------------------ main
if __name__ == "__main__":
    B, S, H, E = 2, 8, 32, 8
    H2 = H // 2

    key = jax.random.PRNGKey(0)
    ks = jax.random.split(key, 12)

    def linear_params(k, fi, fo):
        kw, kb = jax.random.split(k)
        bound = 1.0 / math.sqrt(fi)
        w = jax.random.uniform(kw, (fi, fo), jnp.float32, -bound, bound)
        b = jax.random.uniform(kb, (fo,), jnp.float32, -bound, bound)
        return w, b

    wi1, bi1 = linear_params(ks[0], H, H2)
    wi2, bi2 = linear_params(ks[1], H2, 1)
    wk1, bk1 = linear_params(ks[2], H, H2)
    wk2, bk2 = linear_params(ks[3], H2, 1)
    wr1, br1 = linear_params(ks[4], H, H)
    wr2, br2 = linear_params(ks[5], H, E)
    wu1, bu1 = linear_params(ks[6], H, H)
    wu2, bu2 = linear_params(ks[7], H, E)

    params = dict(
        wi1=wi1, bi1=bi1, wi2=wi2, bi2=bi2,
        wk1=wk1, bk1=bk1, wk2=wk2, bk2=bk2,
        wr1=wr1, br1=br1, wr2=wr2, br2=br2,
        wu1=wu1, bu1=bu1, wu2=wu2, bu2=bu2,
        cache_correction_factor=jax.random.uniform(ks[10], (E,), jnp.float32, 0.5, 1.5),
        cache_usage_history=jnp.zeros((E,), jnp.float32),
        update_counter=jnp.array(0, jnp.int32),
    )

    hidden_states = jax.random.normal(ks[8], (B, S, H), jnp.float32)
    kv_states = jax.random.normal(ks[9], (B, S, H), jnp.float32)

    # --- kv_states present (full path) ---
    out = pikv_router_forward(params, hidden_states, kv_states=kv_states)
    out = jax.block_until_ready(out)
    (dispatch, combine, router_probs, aux_loss, importance,
     new_hist, new_counter, new_ccf) = out

    x_flat = hidden_states.reshape(-1, H)
    kv_flat = kv_states.reshape(-1, H)
    ref_probs, ref_imp = _ref_probs_importance(params, x_flat, kv_flat, 0.5)
    assert jnp.allclose(router_probs.reshape(-1, E), ref_probs, atol=2e-3), "probs mismatch"
    assert jnp.allclose(importance.reshape(-1, 1), ref_imp, atol=1e-4), "importance mismatch"
    cap = int(B * S * 1.5 * 2 / E)
    assert dispatch.shape == (B, S, E, cap)
    assert combine.shape == dispatch.shape

    # --- specialised kv_states=None kernel (no kv stream / kv MLP) ---
    out2 = pikv_router_forward(params, hidden_states, kv_states=None)
    out2 = jax.block_until_ready(out2)
    ref_probs2, ref_imp2 = _ref_probs_importance(params, x_flat, None, 0.5)
    assert jnp.allclose(out2[2].reshape(-1, E), ref_probs2, atol=2e-3), "probs mismatch (no kv)"
    assert jnp.allclose(out2[4].reshape(-1, 1), ref_imp2, atol=1e-4), "importance mismatch (no kv)"

    # TODO(synk): the dense [N,E,capacity] dispatch/combine build reproduces PyTorch's
    # vectorized indexing semantics exactly but will dominate wall clock at production N.
    print("KERNEL_OK")
</pallas_src>

<mosaic_0001>
module attributes {stable_mosaic.version = 11 : i64} {
  func.func @kernel(%arg0: i32, %arg1: memref<16x32xf32, #tpu.memory_space<vmem>>, %arg2: memref<16x32xf32, #tpu.memory_space<vmem>>, %arg3: memref<32x80xf32, #tpu.memory_space<vmem>>, %arg4: memref<1x80xf32, #tpu.memory_space<vmem>>, %arg5: memref<80x17xf32, #tpu.memory_space<vmem>>, %arg6: memref<1x17xf32, #tpu.memory_space<vmem>>, %arg7: memref<32x16xf32, #tpu.memory_space<vmem>>, %arg8: memref<1x16xf32, #tpu.memory_space<vmem>>, %arg9: memref<16x1xf32, #tpu.memory_space<vmem>>, %arg10: memref<1x1xf32, #tpu.memory_space<vmem>>, %arg11: memref<16x128xf32, #tpu.memory_space<vmem>>) attributes {dimension_semantics = [#tpu.dimension_semantics<parallel>], iteration_bounds = array<i64: 1>, scalar_prefetch = 0 : i64, scratch_operands = 0 : i64, tpu.core_type = #tpu.core_type<tc>, window_params = [{transform_indices = @transform_0, window_bounds = array<i64: 16, 32>}, {transform_indices = @transform_1, window_bounds = array<i64: 16, 32>}, {pipeline_mode = #tpu.pipeline_mode<synchronous>, transform_indices = @transform_2, window_bounds = array<i64: 32, 80>}, {pipeline_mode = #tpu.pipeline_mode<synchronous>, transform_indices = @transform_3, window_bounds = array<i64: 1, 80>}, {pipeline_mode = #tpu.pipeline_mode<synchronous>, transform_indices = @transform_4, window_bounds = array<i64: 80, 17>}, {pipeline_mode = #tpu.pipeline_mode<synchronous>, transform_indices = @transform_5, window_bounds = array<i64: 1, 17>}, {pipeline_mode = #tpu.pipeline_mode<synchronous>, transform_indices = @transform_6, window_bounds = array<i64: 32, 16>}, {pipeline_mode = #tpu.pipeline_mode<synchronous>, transform_indices = @transform_7, window_bounds = array<i64: 1, 16>}, {pipeline_mode = #tpu.pipeline_mode<synchronous>, transform_indices = @transform_8, window_bounds = array<i64: 16, 1>}, {pipeline_mode = #tpu.pipeline_mode<synchronous>, transform_indices = @transform_9, window_bounds = array<i64: 1, 1>}, {transform_indices = @transform_10, window_bounds = array<i64: 16, 128>}]} {
    %c0 = arith.constant 0 : index
    %c0_0 = arith.constant 0 : index
    %0 = vector.load %arg1[%c0, %c0_0] : memref<16x32xf32, #tpu.memory_space<vmem>>, vector<16x32xf32>
    %c0_1 = arith.constant 0 : index
    %c0_2 = arith.constant 0 : index
    %1 = vector.load %arg3[%c0_1, %c0_2] : memref<32x80xf32, #tpu.memory_space<vmem>>, vector<32x80xf32>
    %cst = arith.constant dense<0.000000e+00> : vector<16x80xf32>
    %2 = tpu.matmul %0, %1, %cst {dimension_numbers = #tpu.dot_dimension_numbers<[1], [0], [0], [1], [0, 0, 1, 1], [], []>} : vector<16x32xf32>, vector<32x80xf32>, vector<16x80xf32> -> vector<16x80xf32>
    %c0_3 = arith.constant 0 : index
    %c0_4 = arith.constant 0 : index
    %3 = vector.load %arg4[%c0_3, %c0_4] : memref<1x80xf32, #tpu.memory_space<vmem>>, vector<1x80xf32>
    %4 = vector.broadcast %3 : vector<1x80xf32> to vector<16x80xf32>
    %5 = arith.addf %2, %4 : vector<16x80xf32>
    %cst_5 = arith.constant 0.000000e+00 : f32
    %6 = vector.broadcast %cst_5 : f32 to vector<16x80xf32>
    %7 = arith.maximumf %5, %6 : vector<16x80xf32>
    %c0_6 = arith.constant 0 : index
    %c0_7 = arith.constant 0 : index
    %8 = vector.load %arg5[%c0_6, %c0_7] : memref<80x17xf32, #tpu.memory_space<vmem>>, vector<80x17xf32>
    %cst_8 = arith.constant dense<0.000000e+00> : vector<16x17xf32>
    %9 = tpu.matmul %7, %8, %cst_8 {dimension_numbers = #tpu.dot_dimension_numbers<[1], [0], [0], [1], [0, 0, 1, 1], [], []>} : vector<16x80xf32>, vector<80x17xf32>, vector<16x17xf32> -> vector<16x17xf32>
    %c0_9 = arith.constant 0 : index
    %c0_10 = arith.constant 0 : index
    %10 = vector.load %arg6[%c0_9, %c0_10] : memref<1x17xf32, #tpu.memory_space<vmem>>, vector<1x17xf32>
    %11 = vector.broadcast %10 : vector<1x17xf32> to vector<16x17xf32>
    %12 = arith.addf %9, %11 : vector<16x17xf32>
    %13 = vector.extract_strided_slice %12 {offsets = [0, 0], sizes = [16, 1], strides = [1, 1]} : vector<16x17xf32> to vector<16x1xf32>
    %14 = arith.negf %13 : vector<16x1xf32>
    %15 = math.exp %14 : vector<16x1xf32>
    %cst_11 = arith.constant 1.000000e+00 : f32
    %16 = vector.broadcast %cst_11 : f32 to vector<16x1xf32>
    %17 = arith.addf %16, %15 : vector<16x1xf32>
    %18 = arith.divf %16, %17 : vector<16x1xf32>
    %c0_12 = arith.constant 0 : index
    %c0_13 = arith.constant 0 : index
    %19 = vector.load %arg2[%c0_12, %c0_13] : memref<16x32xf32, #tpu.memory_space<vmem>>, vector<16x32xf32>
    %c0_14 = arith.constant 0 : index
    %c0_15 = arith.constant 0 : index
    %20 = vector.load %arg7[%c0_14, %c0_15] : memref<32x16xf32, #tpu.memory_space<vmem>>, vector<32x16xf32>
    %cst_16 = arith.constant dense<0.000000e+00> : vector<16x16xf32>
    %21 = tpu.matmul %19, %20, %cst_16 {dimension_numbers = #tpu.dot_dimension_numbers<[1], [0], [0], [1], [0, 0, 1, 1], [], []>} : vector<16x32xf32>, vector<32x16xf32>, vector<16x16xf32> -> vector<16x16xf32>
    %c0_17 = arith.constant 0 : index
    %c0_18 = arith.constant 0 : index
    %22 = vector.load %arg8[%c0_17, %c0_18] : memref<1x16xf32, #tpu.memory_space<vmem>>, vector<1x16xf32>
    %23 = vector.broadcast %22 : vector<1x16xf32> to vector<16x16xf32>
    %24 = arith.addf %21, %23 : vector<16x16xf32>
    %cst_19 = arith.constant 0.000000e+00 : f32
    %25 = vector.broadcast %cst_19 : f32 to vector<16x16xf32>
    %26 = arith.maximumf %24, %25 : vector<16x16xf32>
    %c0_20 = arith.constant 0 : index
    %c0_21 = arith.constant 0 : index
    %27 = vector.load %arg9[%c0_20, %c0_21] : memref<16x1xf32, #tpu.memory_space<vmem>>, vector<16x1xf32>
    %cst_22 = arith.constant dense<0.000000e+00> : vector<16x1xf32>
    %28 = tpu.matmul %26, %27, %cst_22 {dimension_numbers = #tpu.dot_dimension_numbers<[1], [0], [0], [1], [0, 0, 1, 1], [], []>} : vector<16x16xf32>, vector<16x1xf32>, vector<16x1xf32> -> vector<16x1xf32>
    %c0_23 = arith.constant 0 : index
    %c0_24 = arith.constant 0 : index
    %29 = vector.load %arg10[%c0_23, %c0_24] : memref<1x1xf32, #tpu.memory_space<vmem>>, vector<1x1xf32>
    %30 = vector.broadcast %29 : vector<1x1xf32> to vector<16x1xf32>
    %31 = arith.addf %28, %30 : vector<16x1xf32>
    %32 = arith.negf %31 : vector<16x1xf32>
    %33 = math.exp %32 : vector<16x1xf32>
    %cst_25 = arith.constant 1.000000e+00 : f32
    %34 = vector.broadcast %cst_25 : f32 to vector<16x1xf32>
    %35 = arith.addf %34, %33 : vector<16x1xf32>
    %36 = arith.divf %34, %35 : vector<16x1xf32>
    %37 = arith.addf %18, %36 : vector<16x1xf32>
    %cst_26 = arith.constant 5.000000e-01 : f32
    %38 = vector.broadcast %cst_26 : f32 to vector<16x1xf32>
    %39 = arith.mulf %37, %38 : vector<16x1xf32>
    %40 = vector.extract_strided_slice %12 {offsets = [0, 1], sizes = [16, 8], strides = [1, 1]} : vector<16x17xf32> to vector<16x8xf32>
    %41 = vector.extract_strided_slice %12 {offsets = [0, 9], sizes = [16, 8], strides = [1, 1]} : vector<16x17xf32> to vector<16x8xf32>
    %cst_27 = arith.constant 5.000000e-01 : f32
    %42 = vector.broadcast %cst_27 : f32 to vector<16x1xf32>
    %43 = arith.cmpf ogt, %39, %42 : vector<16x1xf32>
    %44 = vector.shape_cast %43 : vector<16x1xi1> to vector<16x1xi1>
    %45 = vector.broadcast %44 : vector<16x1xi1> to vector<16x8xi1>
    %46 = arith.select %45, %40, %41 : vector<16x8xi1>, vector<16x8xf32>
    %cst_28 = arith.constant dense<0xFF800000> : vector<16xf32>
    %47 = vector.multi_reduction <maximumf>, %46, %cst_28 [1] : vector<16x8xf32> to vector<16xf32>
    %48 = vector.shape_cast %47 : vector<16xf32> to vector<16x1xf32>
    %49 = vector.broadcast %48 : vector<16x1xf32> to vector<16x8xf32>
    %50 = arith.subf %46, %49 : vector<16x8xf32>
    %51 = math.exp %50 : vector<16x8xf32>
    %cst_29 = arith.constant dense<0.000000e+00> : vector<16xf32>
    %52 = vector.multi_reduction <add>, %51, %cst_29 [1] : vector<16x8xf32> to vector<16xf32>
    %53 = vector.shape_cast %52 : vector<16xf32> to vector<16x1xf32>
    %54 = tpu.reciprocal %53 {approx = true} : vector<16x1xf32> -> vector<16x1xf32>
    %55 = vector.broadcast %54 : vector<16x1xf32> to vector<16x8xf32>
    %56 = arith.mulf %51, %55 : vector<16x8xf32>
    %cst_30 = arith.constant 0.000000e+00 : f32
    %57 = vector.broadcast %cst_30 : f32 to vector<16x119xf32>
    %58 = tpu.concatenate %56, %39, %57 in 1 : vector<16x8xf32>, vector<16x1xf32>, vector<16x119xf32> -> vector<16x128xf32>
    %c0_31 = arith.constant 0 : index
    %c0_32 = arith.constant 0 : index
    %59 = vector.load %arg11[%c0_31, %c0_32] : memref<16x128xf32, #tpu.memory_space<vmem>>, vector<16x128xf32>
    tpu.vector_store %arg11[%c0_31, %c0_32], %58 {strides = array<i32>} : memref<16x128xf32, #tpu.memory_space<vmem>>, vector<16x128xf32>,
    return
  }
  func.func @transform_0(%arg0: i32) -> (i32, i32) {
    %c0_i32 = arith.constant 0 : i32
    %c0_i32_0 = arith.constant 0 : i32
    return %arg0, %c0_i32 : i32, i32
  }
  func.func @transform_1(%arg0: i32) -> (i32, i32) {
    %c0_i32 = arith.constant 0 : i32
    %c0_i32_0 = arith.constant 0 : i32
    return %arg0, %c0_i32 : i32, i32
  }
  func.func @transform_2(%arg0: i32) -> (i32, i32) {
    %c0_i32 = arith.constant 0 : i32
    %c0_i32_0 = arith.constant 0 : i32
    %c0_i32_1 = arith.constant 0 : i32
    return %c0_i32, %c0_i32_0 : i32, i32
  }
  func.func @transform_3(%arg0: i32) -> (i32, i32) {
    %c0_i32 = arith.constant 0 : i32
    %c0_i32_0 = arith.constant 0 : i32
    %c0_i32_1 = arith.constant 0 : i32
    return %c0_i32, %c0_i32_0 : i32, i32
  }
  func.func @transform_4(%arg0: i32) -> (i32, i32) {
    %c0_i32 = arith.constant 0 : i32
    %c0_i32_0 = arith.constant 0 : i32
    %c0_i32_1 = arith.constant 0 : i32
    return %c0_i32, %c0_i32_0 : i32, i32
  }
  func.func @transform_5(%arg0: i32) -> (i32, i32) {
    %c0_i32 = arith.constant 0 : i32
    %c0_i32_0 = arith.constant 0 : i32
    %c0_i32_1 = arith.constant 0 : i32
    return %c0_i32, %c0_i32_0 : i32, i32
  }
  func.func @transform_6(%arg0: i32) -> (i32, i32) {
    %c0_i32 = arith.constant 0 : i32
    %c0_i32_0 = arith.constant 0 : i32
    %c0_i32_1 = arith.constant 0 : i32
    return %c0_i32, %c0_i32_0 : i32, i32
  }
  func.func @transform_7(%arg0: i32) -> (i32, i32) {
    %c0_i32 = arith.constant 0 : i32
    %c0_i32_0 = arith.constant 0 : i32
    %c0_i32_1 = arith.constant 0 : i32
    return %c0_i32, %c0_i32_0 : i32, i32
  }
  func.func @transform_8(%arg0: i32) -> (i32, i32) {
    %c0_i32 = arith.constant 0 : i32
    %c0_i32_0 = arith.constant 0 : i32
    %c0_i32_1 = arith.constant 0 : i32
    return %c0_i32, %c0_i32_0 : i32, i32
  }
  func.func @transform_9(%arg0: i32) -> (i32, i32) {
    %c0_i32 = arith.constant 0 : i32
    %c0_i32_0 = arith.constant 0 : i32
    %c0_i32_1 = arith.constant 0 : i32
    return %c0_i32, %c0_i32_0 : i32, i32
  }
  func.func @transform_10(%arg0: i32) -> (i32, i32) {
    %c0_i32 = arith.constant 0 : i32
    %c0_i32_0 = arith.constant 0 : i32
    return %arg0, %c0_i32 : i32, i32
  }
}

</mosaic_0001>

<llo_original>
// kernel: tpu_custom_call.1
$region0: #{tpu_custom_call.1}
  #allocation0 [shape = 'u32[]', space=smem, size = 0x4, offset = 0x4, fixed_abs, tag = 'smem constant byte address 0x4 - core index']
  #allocation1 [shape = 'u32[144,128]{1,0:T(1,128)}', space=vmem, size = 0x12000, scoped, tag = 'internal scratch']
  #allocation2 [shape = 'f32[1,1]{1,0:T(1,128)S(1)}', space=vmem, size = 0x200, scoped, tag = 'scoped memory for tpu_custom_call.1']
  %s0 = inlined_call_operand.vmem [shape: f32[16,32], index: 0, kind: input, shape index: {}]
  %s1 = inlined_call_operand.vmem [shape: f32[16,32], index: 1, kind: input, shape index: {}]
  %s2 = inlined_call_operand.vmem [shape: f32[32,80], index: 2, kind: input, shape index: {}]
  %s3 = inlined_call_operand.vmem [shape: f32[1,80], index: 3, kind: input, shape index: {}]
  %s4 = inlined_call_operand.vmem [shape: f32[80,17], index: 4, kind: input, shape index: {}]
  %s5 = inlined_call_operand.vmem [shape: f32[1,17], index: 5, kind: input, shape index: {}]
  %s6 = inlined_call_operand.vmem [shape: f32[32,16], index: 6, kind: input, shape index: {}]
  %s7 = inlined_call_operand.vmem [shape: f32[1,16], index: 7, kind: input, shape index: {}]
  %s8 = inlined_call_operand.vmem [shape: f32[16,1], index: 8, kind: input, shape index: {}]
  %s9 = inlined_call_operand.<no memory space> [shape: f32[1,1], index: 9, kind: input, shape index: {}]
  %s10 = inlined_call_operand.hbm [shape: f32[16,128], index: 10, kind: output, shape index: {}]
  %s11 = sld [smem:[#allocation0]]
  $region50: #{tpu_custom_call.1} parent=0
    _
  %s13 = ssub.s32 1, %s11
  %s14 = scalar_select 0, %s13, %s11
  %v15 = vstv %s9
  %16 = vst [vmem:[#allocation2] sm:$0x1] %v15
  $region1: #{tpu_custom_call.1} parent=0
    #allocation3 [shape = 'u8[8192]{0}', space=vmem, size = 0x2000, scoped, tag = 'output window, operand 0, single buffered']
    #allocation4 [shape = 's32[1]{0}', space=sflag, size = 0x4, scoped, tag = 'scoped memory for tpu_custom_call.1']
    %17 = vsyncpa [#allocation4], 0
    // Predicated region
    $region2: #{tpu_custom_call.1} parent=1 // pred_check
      _
    $region3: #{tpu_custom_call.1} parent=1 // pred_check_branch
      %19 = sbr.rel (0) target = $region5
    $region4: #{tpu_custom_call.1} parent=1 // pred_region
      _
    $region5: #{tpu_custom_call.1} parent=1 // pred_fallthru
      _
    // Predicated region
    $region6: #{tpu_custom_call.1} parent=1 // pred_check
      _
    $region7: #{tpu_custom_call.1} parent=1 // pred_check_branch
      %21 = sbr.rel (0) target = $region9
    $region8: #{tpu_custom_call.1} parent=1 // pred_region
      _
    $region9: #{tpu_custom_call.1} parent=1 // pred_fallthru
      _
    // Predicated region
    $region10: #{tpu_custom_call.1} parent=1 // pred_check
      _
    $region11: #{tpu_custom_call.1} parent=1 // pred_check_branch
      %23 = sbr.rel (0) target = $region13
    $region12: #{tpu_custom_call.1} parent=1 // pred_region
      _
    $region13: #{tpu_custom_call.1} parent=1 // pred_fallthru
      _
    // Predicated region
    $region14: #{tpu_custom_call.1} parent=1 // pred_check
      _
    $region15: #{tpu_custom_call.1} parent=1 // pred_check_branch
      %25 = sbr.rel (0) target = $region17
    $region16: #{tpu_custom_call.1} parent=1 // pred_region
      _
    $region17: #{tpu_custom_call.1} parent=1 // pred_fallthru
      _
    // Predicated region
    $region18: #{tpu_custom_call.1} parent=1 // pred_check
      _
    $region19: #{tpu_custom_call.1} parent=1 // pred_check_branch
      %27 = sbr.rel (0) target = $region21
    $region20: #{tpu_custom_call.1} parent=1 // pred_region
      _
    $region21: #{tpu_custom_call.1} parent=1 // pred_fallthru
      _
    // Predicated region
    $region22: #{tpu_custom_call.1} parent=1 // pred_check
      _
    $region23: #{tpu_custom_call.1} parent=1 // pred_check_branch
      %29 = sbr.rel (0) target = $region25
    $region24: #{tpu_custom_call.1} parent=1 // pred_region
      _
    $region25: #{tpu_custom_call.1} parent=1 // pred_fallthru
      _
    // Predicated region
    $region26: #{tpu_custom_call.1} parent=1 // pred_check
      _
    $region27: #{tpu_custom_call.1} parent=1 // pred_check_branch
      %31 = sbr.rel (0) target = $region29
    $region28: #{tpu_custom_call.1} parent=1 // pred_region
      _
    $region29: #{tpu_custom_call.1} parent=1 // pred_fallthru
      _
    // Predicated region
    $region30: #{tpu_custom_call.1} parent=1 // pred_check
      _
    $region31: #{tpu_custom_call.1} parent=1 // pred_check_branch
      %33 = sbr.rel (0) target = $region33
    $region32: #{tpu_custom_call.1} parent=1 // pred_region
      _
    $region33: #{tpu_custom_call.1} parent=1 // pred_fallthru
      _
    // Predicated region
    $region34: #{tpu_custom_call.1} parent=1 // pred_check
      _
    $region35: #{tpu_custom_call.1} parent=1 // pred_check_branch
      %35 = sbr.rel (0) target = $region37
    $region36: #{tpu_custom_call.1} parent=1 // pred_region
      _
    $region37: #{tpu_custom_call.1} parent=1 // pred_fallthru
      _
    // Predicated region
    $region38: #{tpu_custom_call.1} parent=1 // pred_check
      _
    $region39: #{tpu_custom_call.1} parent=1 // pred_check_branch
      %37 = sbr.rel (0) target = $region41
    $region40: #{tpu_custom_call.1} parent=1 // pred_region
      _
    $region41: #{tpu_custom_call.1} parent=1 // pred_fallthru
      _
    %v38 = vld [vmem:[%s0] sm:$0xff]
    %v39 = vld [vmem:[%s0 + $0x8] sm:$0xff]
    %v40 = vld [vmem:[%s2] sm:$0xff]
    %v41 = vld [vmem:[%s2 + $0x8] sm:$0xff]
    %v42 = vld [vmem:[%s2 + $0x10] sm:$0xff]
    %v43 = vld [vmem:[%s2 + $0x18] sm:$0xff]
    %v44 = vld [vmem:[%s3] sm:$0x1]
    %v46 = vlaneseq
    %v47 = vshrl.u32 %v46, 7
    %v48 = vsub.s32 0, %v47
    %v49 = vrot.slane %v44, %v48
    %vm51 = vcmask 261120
    %v53 = vsel %vm51, %v38, 0
    %v56 = vsel %vm51, %v39, 0
    %58 = vmatprep.subr.mxu0 0.0
    %59 = vmatpush1.msra.mxu0 %v40
    %60 = vmatprep.subr.mxu0 0.0
    %61 = vmatpush1.msra.mxu0 %v41
    %62 = vmatprep.subr.mxu0 0.0
    %63 = vmatpush1.msra.mxu0 %v42
    %64 = vmatprep.subr.mxu0 0.0
    %65 = vmatpush1.msra.mxu0 %v43
    %66 = vmatprep.subr.mxu0 0.0
    %67 = vmatpush1.msra.mxu0 0.0
    %68 = vmatprep.subr.mxu0 0.0
    %69 = vmatpush1.msra.mxu0 0.0
    %70 = vmatprep.subr.mxu0 0.0
    %71 = vmatpush1.msra.mxu0 0.0
    %72 = vmatprep.subr.mxu0 0.0
    %73 = vmatpush1.msra.mxu0 0.0
    %74 = vmatprep.subr.mxu0 0.0
    %75 = vmatpush1.msra.mxu0 0.0
    %76 = vmatprep.subr.mxu0 0.0
    %77 = vmatpush1.msra.mxu0 0.0
    %78 = vmatprep.subr.mxu0 0.0
    %79 = vmatpush1.msra.mxu0 0.0
    %80 = vmatprep.subr.mxu0 0.0
    %81 = vmatpush1.msra.mxu0 0.0
    %82 = vmatprep.subr.mxu0 0.0
    %83 = vmatpush1.msra.mxu0 0.0
    %84 = vmatprep.subr.mxu0 0.0
    %85 = vmatpush1.msra.mxu0 0.0
    %86 = vmatprep.subr.mxu0 0.0
    %87 = vmatpush1.msra.mxu0 0.0
    %88 = vmatprep.subr.mxu0 0.0
    %89 = vmatpush1.msra.mxu0 0.0
    %90 = vmatprep.subr.mxu0 0.0
    %91 = vmatpush1.msra.mxu0 0.0
    %92 = vmatprep.subr.mxu0 0.0
    %93 = vmatpush1.msra.mxu0 0.0
    %94 = vmatprep.subr.mxu0 0.0
    %95 = vmatpush1.msra.mxu0 0.0
    %96 = vmatprep.subr.mxu0 0.0
    %97 = vmatpush1.msra.mxu0 0.0
    %98 = vmatprep.subr.mxu0 0.0
    %99 = vmatpush1.msra.mxu0 0.0
    %100 = vmatprep.subr.mxu0 0.0
    %101 = vmatpush1.msra.mxu0 0.0
    %102 = vmatprep.subr.mxu0 0.0
    %103 = vmatpush1.msra.mxu0 0.0
    %104 = vmatprep.subr.mxu0 0.0
    %105 = vmatpush1.msra.mxu0 0.0
    %106 = vmatprep.subr.mxu0 0.0
    %107 = vmatpush1.msra.mxu0 0.0
    %108 = vmatprep.subr.mxu0 0.0
    %109 = vmatpush1.msra.mxu0 0.0
    %110 = vmatprep.subr.mxu0 0.0
    %111 = vmatpush1.msra.mxu0 0.0
    %112 = vmatprep.subr.mxu0 0.0
    %113 = vmatpush1.msra.mxu0 0.0
    %114 = vmatprep.subr.mxu0 0.0
    %115 = vmatpush1.msra.mxu0 0.0
    %116 = vmatprep.subr.mxu0 0.0
    %117 = vmatpush1.msra.mxu0 0.0
    %118 = vmatprep.subr.mxu0 0.0
    %119 = vmatpush1.msra.mxu0 0.0
    %120 = vmatprep.subr.mxu0 0.0
    %121 = vmatpush1.msra.mxu0 0.0
    %122 = vmatprep.mubr.f32.mxu0 0.0
    %123 = vmatmul.mubr.f32.gmra.mrb[0].mxu0 %v53
    %v124 = vpop.f32.mrb[0].mxu0
    %v125 = vadd.f32 %v49, %v124
    %v126 = vpop.f32.mrb[0].mxu0
    %127 = vmatprep.mubr.f32.mxu0 0.0
    %128 = vmatmul.mubr.f32.gmra.mrb[0].mxu0 %v56
    %v129 = vpop.f32.mrb[0].mxu0
    %v130 = vadd.f32 %v49, %v129
    %v131 = vpop.f32.mrb[0].mxu0
    %132 = vdwg.mxu0
    %v133 = vmax.f32 %v125, 0.0
    %v134 = vmax.f32 %v130, 0.0
    %v135 = vld [vmem:[%s4] sm:$0xff]
    %v136 = vld [vmem:[%s4 + $0x8] sm:$0xff]
    %v137 = vld [vmem:[%s4 + $0x10] sm:$0xff]
    %v138 = vld [vmem:[%s4 + $0x18] sm:$0xff]
    %v139 = vld [vmem:[%s4 + $0x20] sm:$0xff]
    %v140 = vld [vmem:[%s4 + $0x28] sm:$0xff]
    %v141 = vld [vmem:[%s4 + $0x30] sm:$0xff]
    %v142 = vld [vmem:[%s4 + $0x38] sm:$0xff]
    %v143 = vld [vmem:[%s4 + $0x40] sm:$0xff]
    %v144 = vld [vmem:[%s4 + $0x48] sm:$0xff]
    %v145 = vld [vmem:[%s5] sm:$0x1]
    %v147 = vlaneseq
    %v148 = vshrl.u32 %v147, 7
    %v149 = vsub.s32 0, %v148
    %v150 = vrot.slane %v145, %v149
    %vm152 = vcmask 654336
    %v154 = vsel %vm152, %v133, 0
    %v157 = vsel %vm152, %v134, 0
    %159 = vmatprep.subr.mxu0 0.0
    %160 = vmatpush1.msra.mxu0 %v135
    %161 = vmatprep.subr.mxu0 0.0
    %162 = vmatpush1.msra.mxu0 %v136
    %163 = vmatprep.subr.mxu0 0.0
    %164 = vmatpush1.msra.mxu0 %v137
    %165 = vmatprep.subr.mxu0 0.0
    %166 = vmatpush1.msra.mxu0 %v138
    %167 = vmatprep.subr.mxu0 0.0
    %168 = vmatpush1.msra.mxu0 %v139
    %169 = vmatprep.subr.mxu0 0.0
    %170 = vmatpush1.msra.mxu0 %v140
    %171 = vmatprep.subr.mxu0 0.0
    %172 = vmatpush1.msra.mxu0 %v141
    %173 = vmatprep.subr.mxu0 0.0
    %174 = vmatpush1.msra.mxu0 %v142
    %175 = vmatprep.subr.mxu0 0.0
    %176 = vmatpush1.msra.mxu0 %v143
    %177 = vmatprep.subr.mxu0 0.0
    %178 = vmatpush1.msra.mxu0 %v144
    %179 = vmatprep.subr.mxu0 0.0
    %180 = vmatpush1.msra.mxu0 0.0
    %181 = vmatprep.subr.mxu0 0.0
    %182 = vmatpush1.msra.mxu0 0.0
    %183 = vmatprep.subr.mxu0 0.0
    %184 = vmatpush1.msra.mxu0 0.0
    %185 = vmatprep.subr.mxu0 0.0
    %186 = vmatpush1.msra.mxu0 0.0
    %187 = vmatprep.subr.mxu0 0.0
    %188 = vmatpush1.msra.mxu0 0.0
    %189 = vmatprep.subr.mxu0 0.0
    %190 = vmatpush1.msra.mxu0 0.0
    %191 = vmatprep.subr.mxu0 0.0
    %192 = vmatpush1.msra.mxu0 0.0
    %193 = vmatprep.subr.mxu0 0.0
    %194 = vmatpush1.msra.mxu0 0.0
    %195 = vmatprep.subr.mxu0 0.0
    %196 = vmatpush1.msra.mxu0 0.0
    %197 = vmatprep.subr.mxu0 0.0
    %198 = vmatpush1.msra.mxu0 0.0
    %199 = vmatprep.subr.mxu0 0.0
    %200 = vmatpush1.msra.mxu0 0.0
    %201 = vmatprep.subr.mxu0 0.0
    %202 = vmatpush1.msra.mxu0 0.0
    %203 = vmatprep.subr.mxu0 0.0
    %204 = vmatpush1.msra.mxu0 0.0
    %205 = vmatprep.subr.mxu0 0.0
    %206 = vmatpush1.msra.mxu0 0.0
    %207 = vmatprep.subr.mxu0 0.0
    %208 = vmatpush1.msra.mxu0 0.0
    %209 = vmatprep.subr.mxu0 0.0
    %210 = vmatpush1.msra.mxu0 0.0
    %211 = vmatprep.subr.mxu0 0.0
    %212 = vmatpush1.msra.mxu0 0.0
    %213 = vmatprep.subr.mxu0 0.0
    %214 = vmatpush1.msra.mxu0 0.0
    %215 = vmatprep.subr.mxu0 0.0
    %216 = vmatpush1.msra.mxu0 0.0
    %217 = vmatprep.subr.mxu0 0.0
    %218 = vmatpush1.msra.mxu0 0.0
    %219 = vmatprep.subr.mxu0 0.0
    %220 = vmatpush1.msra.mxu0 0.0
    %221 = vmatprep.subr.mxu0 0.0
    %222 = vmatpush1.msra.mxu0 0.0
    %223 = vmatprep.mubr.f32.mxu0 0.0
    %224 = vmatmul.mubr.f32.gmra.mrb[0].mxu0 %v154
    %v225 = vpop.f32.mrb[0].mxu0
    %v226 = vadd.f32 %v150, %v225
    %v227 = vpop.f32.mrb[0].mxu0
    %228 = vmatprep.mubr.f32.mxu0 0.0
    %229 = vmatmul.mubr.f32.gmra.mrb[0].mxu0 %v157
    %v230 = vpop.f32.mrb[0].mxu0
    %v231 = vadd.f32 %v150, %v230
    %v232 = vpop.f32.mrb[0].mxu0
    %233 = vdwg.mxu0
    %v234 = vxor.u32 %v226, 2147483648
    %v235 = vxor.u32 %v231, 2147483648
    %v236 = vmul.f32 %v234, 1.442695
    %v237 = vpow.pop %v236
    %v238 = vmul.f32 %v235, 1.442695
    %v239 = vpow.pop %v238
    %v240 = vadd.f32 %v237, 1.0
    %v241 = vadd.f32 %v239, 1.0
    %v242 = vrcp.pop %v240
    %v243 = vmul.f32 1.0, %v242
    %v244 = vrcp.pop %v241
    %v245 = vmul.f32 1.0, %v244
    %v246 = vld [vmem:[%s1] sm:$0xff]
    %v247 = vld [vmem:[%s1 + $0x8] sm:$0xff]
    %v248 = vld [vmem:[%s6] sm:$0xff]
    %v249 = vld [vmem:[%s6 + $0x8] sm:$0xff]
    %v250 = vld [vmem:[%s6 + $0x10] sm:$0xff]
    %v251 = vld [vmem:[%s6 + $0x18] sm:$0xff]
    %v252 = vld [vmem:[%s7] sm:$0x1]
    %v254 = vlaneseq
    %v255 = vshrl.u32 %v254, 7
    %v256 = vsub.s32 0, %v255
    %v257 = vrot.slane %v252, %v256
    %v260 = vsel %vm51, %v246, 0
    %v263 = vsel %vm51, %v247, 0
    %265 = vmatprep.subr.mxu0 0.0
    %266 = vmatpush1.msra.mxu0 %v248
    %267 = vmatprep.subr.mxu0 0.0
    %268 = vmatpush1.msra.mxu0 %v249
    %269 = vmatprep.subr.mxu0 0.0
    %270 = vmatpush1.msra.mxu0 %v250
    %271 = vmatprep.subr.mxu0 0.0
    %272 = vmatpush1.msra.mxu0 %v251
    %273 = vmatprep.subr.mxu0 0.0
    %274 = vmatpush1.msra.mxu0 0.0
    %275 = vmatprep.subr.mxu0 0.0
    %276 = vmatpush1.msra.mxu0 0.0
    %277 = vmatprep.subr.mxu0 0.0
    %278 = vmatpush1.msra.mxu0 0.0
    %279 = vmatprep.subr.mxu0 0.0
    %280 = vmatpush1.msra.mxu0 0.0
    %281 = vmatprep.subr.mxu0 0.0
    %282 = vmatpush1.msra.mxu0 0.0
    %283 = vmatprep.subr.mxu0 0.0
    %284 = vmatpush1.msra.mxu0 0.0
    %285 = vmatprep.subr.mxu0 0.0
    %286 = vmatpush1.msra.mxu0 0.0
    %287 = vmatprep.subr.mxu0 0.0
    %288 = vmatpush1.msra.mxu0 0.0
    %289 = vmatprep.subr.mxu0 0.0
    %290 = vmatpush1.msra.mxu0 0.0
    %291 = vmatprep.subr.mxu0 0.0
    %292 = vmatpush1.msra.mxu0 0.0
    %293 = vmatprep.subr.mxu0 0.0
    %294 = vmatpush1.msra.mxu0 0.0
    %295 = vmatprep.subr.mxu0 0.0
    %296 = vmatpush1.msra.mxu0 0.0
    %297 = vmatprep.subr.mxu0 0.0
    %298 = vmatpush1.msra.mxu0 0.0
    %299 = vmatprep.subr.mxu0 0.0
    %300 = vmatpush1.msra.mxu0 0.0
    %301 = vmatprep.subr.mxu0 0.0
    %302 = vmatpush1.msra.mxu0 0.0
    %303 = vmatprep.subr.mxu0 0.0
    %304 = vmatpush1.msra.mxu0 0.0
    %305 = vmatprep.subr.mxu0 0.0
    %306 = vmatpush1.msra.mxu0 0.0
    %307 = vmatprep.subr.mxu0 0.0
    %308 = vmatpush1.msra.mxu0 0.0
    %309 = vmatprep.subr.mxu0 0.0
    %310 = vmatpush1.msra.mxu0 0.0
    %311 = vmatprep.subr.mxu0 0.0
    %312 = vmatpush1.msra.mxu0 0.0
    %313 = vmatprep.subr.mxu0 0.0
    %314 = vmatpush1.msra.mxu0 0.0
    %315 = vmatprep.subr.mxu0 0.0
    %316 = vmatpush1.msra.mxu0 0.0
    %317 = vmatprep.subr.mxu0 0.0
    %318 = vmatpush1.msra.mxu0 0.0
    %319 = vmatprep.subr.mxu0 0.0
    %320 = vmatpush1.msra.mxu0 0.0
    %321 = vmatprep.subr.mxu0 0.0
    %322 = vmatpush1.msra.mxu0 0.0
    %323 = vmatprep.subr.mxu0 0.0
    %324 = vmatpush1.msra.mxu0 0.0
    %325 = vmatprep.subr.mxu0 0.0
    %326 = vmatpush1.msra.mxu0 0.0
    %327 = vmatprep.subr.mxu0 0.0
    %328 = vmatpush1.msra.mxu0 0.0
    %329 = vmatprep.mubr.f32.mxu0 0.0
    %330 = vmatmul.mubr.f32.gmra.mrb[0].mxu0 %v260
    %v331 = vpop.f32.mrb[0].mxu0
    %v332 = vadd.f32 %v257, %v331
    %v333 = vpop.f32.mrb[0].mxu0
    %334 = vmatprep.mubr.f32.mxu0 0.0
    %335 = vmatmul.mubr.f32.gmra.mrb[0].mxu0 %v263
    %v336 = vpop.f32.mrb[0].mxu0
    %v337 = vadd.f32 %v257, %v336
    %v338 = vpop.f32.mrb[0].mxu0
    %339 = vdwg.mxu0
    %v340 = vmax.f32 %v332, 0.0
    %v341 = vmax.f32 %v337, 0.0
    %v342 = vld [vmem:[%s8] sm:$0xff]
    %v343 = vld [vmem:[%s8 + $0x8] sm:$0xff]
    %v344 = vld [vmem:[#allocation2] sm:$0x1]
    %v346 = vlaneseq
    %v347 = vshrl.u32 %v346, 7
    %v348 = vsub.s32 0, %v347
    %v349 = vrot.slane %v344, %v348
    %vm351 = vcmask 130048
    %v353 = vsel %vm351, %v340, 0
    %v356 = vsel %vm351, %v341, 0
    %358 = vmatprep.subr.mxu0 0.0
    %359 = vmatpush1.msra.mxu0 %v342
    %360 = vmatprep.subr.mxu0 0.0
    %361 = vmatpush1.msra.mxu0 %v343
    %362 = vmatprep.subr.mxu0 0.0
    %363 = vmatpush1.msra.mxu0 0.0
    %364 = vmatprep.subr.mxu0 0.0
    %365 = vmatpush1.msra.mxu0 0.0
    %366 = vmatprep.subr.mxu0 0.0
    %367 = vmatpush1.msra.mxu0 0.0
    %368 = vmatprep.subr.mxu0 0.0
    %369 = vmatpush1.msra.mxu0 0.0
    %370 = vmatprep.subr.mxu0 0.0
    %371 = vmatpush1.msra.mxu0 0.0
    %372 = vmatprep.subr.mxu0 0.0
    %373 = vmatpush1.msra.mxu0 0.0
    %374 = vmatprep.subr.mxu0 0.0
    %375 = vmatpush1.msra.mxu0 0.0
    %376 = vmatprep.subr.mxu0 0.0
    %377 = vmatpush1.msra.mxu0 0.0
    %378 = vmatprep.subr.mxu0 0.0
    %379 = vmatpush1.msra.mxu0 0.0
    %380 = vmatprep.subr.mxu0 0.0
    %381 = vmatpush1.msra.mxu0 0.0
    %382 = vmatprep.subr.mxu0 0.0
    %383 = vmatpush1.msra.mxu0 0.0
    %384 = vmatprep.subr.mxu0 0.0
    %385 = vmatpush1.msra.mxu0 0.0
    %386 = vmatprep.subr.mxu0 0.0
    %387 = vmatpush1.msra.mxu0 0.0
    %388 = vmatprep.subr.mxu0 0.0
    %389 = vmatpush1.msra.mxu0 0.0
    %390 = vmatprep.subr.mxu0 0.0
    %391 = vmatpush1.msra.mxu0 0.0
    %392 = vmatprep.subr.mxu0 0.0
    %393 = vmatpush1.msra.mxu0 0.0
    %394 = vmatprep.subr.mxu0 0.0
    %395 = vmatpush1.msra.mxu0 0.0
    %396 = vmatprep.subr.mxu0 0.0
    %397 = vmatpush1.msra.mxu0 0.0
    %398 = vmatprep.subr.mxu0 0.0
    %399 = vmatpush1.msra.mxu0 0.0
    %400 = vmatprep.subr.mxu0 0.0
    %401 = vmatpush1.msra.mxu0 0.0
    %402 = vmatprep.subr.mxu0 0.0
    %403 = vmatpush1.msra.mxu0 0.0
    %404 = vmatprep.subr.mxu0 0.0
    %405 = vmatpush1.msra.mxu0 0.0
    %406 = vmatprep.subr.mxu0 0.0
    %407 = vmatpush1.msra.mxu0 0.0
    %408 = vmatprep.subr.mxu0 0.0
    %409 = vmatpush1.msra.mxu0 0.0
    %410 = vmatprep.subr.mxu0 0.0
    %411 = vmatpush1.msra.mxu0 0.0
    %412 = vmatprep.subr.mxu0 0.0
    %413 = vmatpush1.msra.mxu0 0.0
    %414 = vmatprep.subr.mxu0 0.0
    %415 = vmatpush1.msra.mxu0 0.0
    %416 = vmatprep.subr.mxu0 0.0
    %417 = vmatpush1.msra.mxu0 0.0
    %418 = vmatprep.subr.mxu0 0.0
    %419 = vmatpush1.msra.mxu0 0.0
    %420 = vmatprep.subr.mxu0 0.0
    %421 = vmatpush1.msra.mxu0 0.0
    %422 = vmatprep.mubr.f32.mxu0 0.0
    %423 = vmatmul.mubr.f32.gmra.mrb[0].mxu0 %v353
    %v424 = vpop.f32.mrb[0].mxu0
    %v425 = vadd.f32 %v349, %v424
    %v426 = vpop.f32.mrb[0].mxu0
    %427 = vmatprep.mubr.f32.mxu0 0.0
    %428 = vmatmul.mubr.f32.gmra.mrb[0].mxu0 %v356
    %v429 = vpop.f32.mrb[0].mxu0
    %v430 = vadd.f32 %v349, %v429
    %v431 = vpop.f32.mrb[0].mxu0
    %432 = vdwg.mxu0
    %v433 = vxor.u32 %v425, 2147483648
    %v434 = vxor.u32 %v430, 2147483648
    %v435 = vmul.f32 %v433, 1.442695
    %v436 = vpow.pop %v435
    %v437 = vmul.f32 %v434, 1.442695
    %v438 = vpow.pop %v437
    %v439 = vadd.f32 %v436, 1.0
    %v440 = vadd.f32 %v438, 1.0
    %v441 = vrcp.pop %v439
    %v442 = vmul.f32 1.0, %v441
    %v443 = vrcp.pop %v440
    %v444 = vmul.f32 1.0, %v443
    %v445 = vadd.f32 %v243, %v442
    %v446 = vadd.f32 %v245, %v444
    %v447 = vmul.f32 %v445, 0.5
    %v448 = vmul.f32 %v446, 0.5
    %vm449 = vcmp.gt.f32.partialorder %v447, 0.5
    %vm450 = vcmp.gt.f32.partialorder %v448, 0.5
    %v451 = vsel %vm449, 1, 0
    %v452 = vsel %vm450, 1, 0
    %453 = vset.pattern.permute.xlu0 0
    %454 = vperm.xlu0 %453, %v451
    %v455 = vpop.permute.xlu0 %454
    %456 = vset.pattern.permute.xlu0 0
    %457 = vperm.xlu0 %456, %v452
    %v458 = vpop.permute.xlu0 %457
    %vm459 = vcmp.eq.s32.totalorder %v455, 1
    %vm460 = vcmp.eq.s32.totalorder %v458, 1
    %463 = vrot.lane.b32.xlu0 %v226, 120
    %v464 = vpop.permute.xlu0 %463
    %465 = vrot.lane.b32.xlu0 %v231, 120
    %v466 = vpop.permute.xlu0 %465
    %v469 = vsel %vm459, %v226, %v464
    %v470 = vsel %vm460, %v231, %v466
    %vm471 = vcmask 72712
    %v472 = vsel %vm471, %v469, -inf
    %473 = vmax.xlane.f32.xlu0 %v472
    %v474 = vpop.xlane.xlu0 %473
    %v475 = vsel %vm471, %v470, -inf
    %476 = vmax.xlane.f32.xlu0 %v475
    %v477 = vpop.xlane.xlu0 %476
    %v478 = vsub.f32 %v469, %v474
    %v479 = vsub.f32 %v470, %v477
    %v480 = vmul.f32 %v478, 1.442695
    %v481 = vpow.pop %v480
    %v482 = vmul.f32 %v479, 1.442695
    %v483 = vpow.pop %v482
    %486 = vrot.lane.b32.xlu0 %v481, 127
    %v487 = vpop.permute.xlu0 %486
    %488 = vrot.lane.b32.xlu0 %v483, 127
    %v489 = vpop.permute.xlu0 %488
    %vm492 = vcmask 64512
    %v493 = vsel %vm492, %v487, 0.0
    %494 = vadd.xlane.f32.xlu0 %v493
    %v495 = vpop.xlane.xlu0 %494
    %v496 = vsel %vm492, %v489, 0.0
    %497 = vadd.xlane.f32.xlu0 %v496
    %v498 = vpop.xlane.xlu0 %497
    %v499 = vrcp.pop %v495
    %v500 = vrcp.pop %v498
    %v501 = vmul.f32 %v481, %v499
    %v502 = vmul.f32 %v483, %v500
    %505 = vrot.lane.b32.xlu0 %v501, 127
    %v506 = vpop.permute.xlu0 %505
    %507 = vrot.lane.b32.xlu0 %v502, 127
    %v508 = vpop.permute.xlu0 %507
    %513 = vrot.lane.b32.xlu0 %v447, 8
    %v514 = vpop.permute.xlu0 %513
    %515 = vrot.lane.b32.xlu0 %v448, 8
    %v516 = vpop.permute.xlu0 %515
    %v519 = vsel %vm492, %v506, %v514
    %v520 = vsel %vm492, %v508, %v516
    %vm521 = vcmask 72704
    %v522 = vsel %vm521, %v519, 0.0
    %v523 = vsel %vm521, %v520, 0.0
    %524 = vst [vmem:[#allocation3] sm:$0xff] %v522
    %525 = vst [vmem:[#allocation3 + $0x8] sm:$0xff] %v523
    // Predicated region
    $region42: #{tpu_custom_call.1} parent=1 // pred_check
      _
    $region43: #{tpu_custom_call.1} parent=1 // pred_check_branch
      %527 = sbr.rel (0) target = $region45
    $region44: #{tpu_custom_call.1} parent=1 // pred_region
      %s529 = ssub.s32 256, 256
      %530 = vsyncadd [#allocation4], %s529
      %s531 = sshll.u32 [#allocation3], 4
      %s532 = int_to_ptr.vmem [resolvable:$true] %s531
      %537 = dma.vmem_to_hbm [thread:$0]  %s532, 256, %s10, [#allocation4], 128, 128, 8
    $region45: #{tpu_custom_call.1} parent=1 // pred_fallthru
      _
    // Predicated region
    $region46: #{tpu_custom_call.1} parent=1 // pred_check
      _
    $region47: #{tpu_custom_call.1} parent=1 // pred_check_branch
      %539 = sbr.rel (0) target = $region49
    $region48: #{tpu_custom_call.1} parent=1 // pred_region
      %540 = dma.done [#allocation4], 256
    $region49: #{tpu_custom_call.1} parent=1 // pred_fallthru
      _
    %541 = vsyncpa [#allocation4], 1

</llo_original>
